<compile_context>
chip_gen: v5e
topology: v5e:2x2
jax: 0.10.0
libtpu: 0.0.40
codegen_flags: <defaults>
</compile_context>

<pallas_src>
import functools

import jax
import jax.numpy as jnp
from jax import lax
from jax.experimental import pallas as pl
from jax.experimental.pallas import tpu as pltpu


def _cosine_loss_kernel(x_ref, tgt_ref, out_ref, *, xent, n_rows, block_rows,
                        compute_dtype):
    i = pl.program_id(0)

    # Wide (TN, C) elementwise chain in `compute_dtype` (f32 by default; bf16
    # fast path on v6e/v7x via use_bf16_compute).  All per-row (TN, 1)
    # accumulations and the scalar epilogue math stay in f32.
    x = x_ref[...].astype(compute_dtype)          # (TN, C)
    tgt = tgt_ref[...]                            # (TN, 1) int32
    tn, c = x.shape

    # Rows past the true batch size (ragged last tile) are NOT zeroed here:
    # every reduction below is per-row (axis=-1), so garbage / NaN / Inf in
    # padded rows stays confined to those rows, and the single `contrib`
    # select at the end discards it.  This is the sole guard — keep it.
    row = lax.broadcasted_iota(jnp.int32, (tn, 1), 0) + i * block_rows
    valid = row < n_rows                          # (TN, 1) bool

    # Per-row sum-of-squares and the logit at the target index.  The one-hot
    # is never materialized: iota compare + select, a single VPU op per elem.
    col = lax.broadcasted_iota(jnp.int32, (tn, c), 1)
    x_t = jnp.sum(jnp.where(col == tgt, x, 0.0), axis=-1, keepdims=True,
                  dtype=jnp.float32)                                  # (TN,1)
    sumsq = jnp.sum(x * x, axis=-1, keepdims=True, dtype=jnp.float32)  # (TN,1)

    # --- cosine_embedding_loss with y=+1 and a unit-norm one-hot second arg:
    #     1 - x_t / max(||x||, 1e-8)       (torch cosine_similarity eps)
    # rsqrt(max(sumsq, eps^2)) == 1 / max(||x||, eps) since sqrt is monotone.
    inv8 = lax.rsqrt(jnp.maximum(sumsq, 1e-16))
    cos_loss = 1.0 - x_t * inv8                                       # (TN,1)

    # --- cross_entropy(F.normalize(x), target).  F.normalize eps = 1e-12.
    # INVARIANT: xn = x / max(||x||, 1e-12) lies in [-1, 1] by construction,
    # so exp() cannot overflow and the log-sum-exp max shift is skipped.  If
    # the normalization / eps ever changes, reinstate the max shift.
    inv12 = lax.rsqrt(jnp.maximum(sumsq, 1e-24))
    xn = x * inv12.astype(compute_dtype)                              # (TN,C)
    lse = jnp.log(jnp.sum(jnp.exp(xn), axis=-1, keepdims=True,
                          dtype=jnp.float32))                         # (TN,1)
    cent = lse - x_t * inv12                     # -log_softmax(xn)[target]

    # Single fused reduction over the tile; the one select here also discards
    # the unmasked padded rows (see comment above).
    contrib = jnp.where(valid, cos_loss + xent * cent, 0.0)
    partial = jnp.sum(contrib)

    # Lane-dense (8,128) partial-sum block -> unmasked stores, and a distinct
    # output block per grid step so the batch axis is truly 'parallel'.
    out_ref[...] = jnp.full(out_ref.shape, partial, dtype=jnp.float32)


def _vmem_capacity_bytes():
    try:
        return pltpu.get_tpu_info().vmem_capacity_bytes
    except Exception:
        return 64 * 1024 * 1024   # conservative fallback (v7x per-TC VMEM)


def _per_row_vmem_bytes(c, x_itemsize):
    # Double-buffered x input (actual HBM dtype)
    # + double-buffered (TN,1) int32 target (lane-pads to 128 lanes)
    # + ~4 live f32 (TN,C) temporaries (cast x, col iota, xn, exp(xn)).
    return 2 * c * x_itemsize + 2 * 128 * 4 + 4 * c * 4


def _default_block_rows(n, c, x_itemsize):
    # Spend ~70% of VMEM on the per-step working set: ~8 MiB f32 x-blocks on
    # 128-MiB parts (v5e/v6e), ~7 MiB on v7x (64 MiB).  Big enough to dwarf
    # the ~0.35 us/step overhead, small enough to double-buffer comfortably.
    budget = int(_vmem_capacity_bytes() * 0.70)
    rows = budget // max(_per_row_vmem_bytes(c, x_itemsize), 1)
    rows = max(8, min(2048, (rows // 8) * 8))
    padded_n = ((n + 7) // 8) * 8
    return min(rows, padded_n)


def _vmem_limit_bytes(block_rows, c, x_itemsize):
    # Scale the Mosaic scoped-VMEM limit with the actual footprint (+ margin),
    # clamped to 80% of physical VMEM so there is always headroom.
    est = block_rows * _per_row_vmem_bytes(c, x_itemsize) + (4 << 20)
    cap = int(_vmem_capacity_bytes() * 0.80)
    return max(16 << 20, min(est, cap))


def cosine_loss(x, target, xent=0.1, block_rows=None, use_bf16_compute=False):
    """CosineLoss forward.

    x: (N, C) logits.  Passing x as bf16 is the recommended contract on
       v5e/v6e (HBM-bound: halves bytes read); the in-kernel cast handles it.
    target: (N,) int class indices.
    use_bf16_compute: bf16 wide elementwise/exp chain (v6e/v7x VALU/EUP are
       bf16-capable, ~1.5-2x in the compute-bound regime); ~1e-3-level
       relative error vs the f32 reference — intentional trade-off.
    """
    n, c = x.shape
    itemsize = jnp.dtype(x.dtype).itemsize
    if block_rows is None:
        block_rows = _default_block_rows(n, c, itemsize)
    block_rows = max(8, (block_rows // 8) * 8)
    num_tiles = pl.cdiv(n, block_rows)
    vmem_limit = _vmem_limit_bytes(block_rows, c, itemsize)

    tgt = target.reshape(n, 1).astype(jnp.int32)
    compute_dtype = jnp.bfloat16 if use_bf16_compute else jnp.float32

    kernel = functools.partial(
        _cosine_loss_kernel, xent=float(xent), n_rows=n,
        block_rows=block_rows, compute_dtype=compute_dtype)

    partials = pl.pallas_call(
        kernel,
        out_shape=jax.ShapeDtypeStruct((num_tiles, 8, 128), jnp.float32),
        grid_spec=pl.GridSpec(
            grid=(num_tiles,),
            in_specs=[
                pl.BlockSpec((block_rows, c), lambda i: (i, 0)),
                pl.BlockSpec((block_rows, 1), lambda i: (i, 0)),
            ],
            out_specs=pl.BlockSpec((1, 8, 128), lambda i: (i, 0, 0)),
        ),
        compiler_params=pltpu.CompilerParams(
            dimension_semantics=("parallel",),
            vmem_limit_bytes=vmem_limit,
        ),
    )(x, tgt)

    # Tiny epilogue in JAX: sum per-tile partial sums, divide by the true N.
    return jnp.sum(partials[:, 0, 0]) / n


def _reference(x, target, xent):
    c = x.shape[-1]
    onehot = jax.nn.one_hot(target, c, dtype=jnp.float32)
    norm = jnp.linalg.norm(x, axis=-1, keepdims=True)
    cos = jnp.sum(x * onehot, -1, keepdims=True) / jnp.maximum(norm, 1e-8)
    cos_loss_ref = jnp.mean(1.0 - cos)
    xn = x / jnp.maximum(norm, 1e-12)
    logp = jax.nn.log_softmax(xn, axis=-1)
    cent_ref = -jnp.mean(jnp.sum(logp * onehot, -1))
    return cos_loss_ref + xent * cent_ref


if __name__ == "__main__":
    key = jax.random.PRNGKey(0)
    kx, kt = jax.random.split(key)

    # Small but non-trivial: N=20 is not a multiple of the 8-row tile, so the
    # multi-tile path and ragged-last-tile masking are both exercised.
    n, c = 20, 32
    x = jax.random.normal(kx, (n, c), dtype=jnp.float32)
    target = jax.random.randint(kt, (n,), 0, c, dtype=jnp.int32)
    ref = _reference(x, target, 0.1)

    # 1) forced small tiles -> multi-tile, ragged last tile, 'parallel' grid.
    loss_small = cosine_loss(x, target, xent=0.1, block_rows=8)
    jax.block_until_ready(loss_small)
    assert jnp.allclose(loss_small, ref, atol=1e-5, rtol=1e-5), (loss_small, ref)

    # 2) auto-sized tiles (budget-derived block + matching vmem limit).
    loss_auto = cosine_loss(x, target, xent=0.1)
    jax.block_until_ready(loss_auto)
    assert jnp.allclose(loss_auto, ref, atol=1e-5, rtol=1e-5), (loss_auto, ref)

    # 3) bf16 HBM input (recommended contract on v5e/v6e); looser tolerance.
    loss_bf16 = cosine_loss(x.astype(jnp.bfloat16), target, xent=0.1)
    jax.block_until_ready(loss_bf16)
    assert jnp.allclose(loss_bf16, ref, atol=2e-2, rtol=2e-2), (loss_bf16, ref)

    print("KERNEL_OK")
</pallas_src>

<mosaic_0001>
module attributes {stable_mosaic.version = 11 : i64} {
  func.func @_cosine_loss_kernel(%arg0: i32, %arg1: memref<8x32xf32, #tpu.memory_space<vmem>>, %arg2: memref<8x1xi32, #tpu.memory_space<vmem>>, %arg3: memref<1x8x128xf32, #tpu.memory_space<vmem>>) attributes {dimension_semantics = [#tpu.dimension_semantics<parallel>], iteration_bounds = array<i64: 3>, scalar_prefetch = 0 : i64, scratch_operands = 0 : i64, tpu.core_type = #tpu.core_type<tc>, window_params = [{transform_indices = @transform_0, window_bounds = array<i64: 8, 32>}, {transform_indices = @transform_1, window_bounds = array<i64: 8, 1>}, {transform_indices = @transform_2, window_bounds = array<i64: 1, 8, 128>}]} {
    %c0 = arith.constant 0 : index
    %c0_0 = arith.constant 0 : index
    %0 = vector.load %arg1[%c0, %c0_0] : memref<8x32xf32, #tpu.memory_space<vmem>>, vector<8x32xf32>
    %c0_1 = arith.constant 0 : index
    %c0_2 = arith.constant 0 : index
    %1 = vector.load %arg2[%c0_1, %c0_2] : memref<8x1xi32, #tpu.memory_space<vmem>>, vector<8x1xi32>
    %2 = tpu.iota {dimensions = array<i32: 0>} : vector<8x1xi32>
    %c8_i32 = arith.constant 8 : i32
    %3 = arith.muli %arg0, %c8_i32 : i32
    %4 = vector.broadcast %3 : i32 to vector<8x1xi32>
    %5 = arith.addi %2, %4 : vector<8x1xi32>
    %c20_i32 = arith.constant 20 : i32
    %6 = vector.broadcast %c20_i32 : i32 to vector<8x1xi32>
    %7 = arith.cmpi slt, %5, %6 : vector<8x1xi32>
    %8 = tpu.iota {dimensions = array<i32: 1>} : vector<8x32xi32>
    %9 = vector.broadcast %1 : vector<8x1xi32> to vector<8x32xi32>
    %10 = arith.cmpi eq, %8, %9 : vector<8x32xi32>
    %cst = arith.constant 0.000000e+00 : f32
    %11 = vector.broadcast %cst : f32 to vector<8x32xf32>
    %12 = arith.select %10, %0, %11 : vector<8x32xi1>, vector<8x32xf32>
    %cst_3 = arith.constant dense<0.000000e+00> : vector<8xf32>
    %13 = vector.multi_reduction <add>, %12, %cst_3 [1] : vector<8x32xf32> to vector<8xf32>
    %14 = vector.shape_cast %13 : vector<8xf32> to vector<8x1xf32>
    %15 = arith.mulf %0, %0 : vector<8x32xf32>
    %cst_4 = arith.constant dense<0.000000e+00> : vector<8xf32>
    %16 = vector.multi_reduction <add>, %15, %cst_4 [1] : vector<8x32xf32> to vector<8xf32>
    %17 = vector.shape_cast %16 : vector<8xf32> to vector<8x1xf32>
    %cst_5 = arith.constant 1.000000e-16 : f32
    %18 = vector.broadcast %cst_5 : f32 to vector<8x1xf32>
    %19 = arith.maximumf %17, %18 : vector<8x1xf32>
    %20 = math.rsqrt %19 : vector<8x1xf32>
    %21 = arith.mulf %14, %20 : vector<8x1xf32>
    %cst_6 = arith.constant 1.000000e+00 : f32
    %22 = vector.broadcast %cst_6 : f32 to vector<8x1xf32>
    %23 = arith.subf %22, %21 : vector<8x1xf32>
    %cst_7 = arith.constant 1.000000e-24 : f32
    %24 = vector.broadcast %cst_7 : f32 to vector<8x1xf32>
    %25 = arith.maximumf %17, %24 : vector<8x1xf32>
    %26 = math.rsqrt %25 : vector<8x1xf32>
    %27 = vector.broadcast %26 : vector<8x1xf32> to vector<8x32xf32>
    %28 = arith.mulf %0, %27 : vector<8x32xf32>
    %29 = math.exp %28 : vector<8x32xf32>
    %cst_8 = arith.constant dense<0.000000e+00> : vector<8xf32>
    %30 = vector.multi_reduction <add>, %29, %cst_8 [1] : vector<8x32xf32> to vector<8xf32>
    %31 = vector.shape_cast %30 : vector<8xf32> to vector<8x1xf32>
    %32 = math.log %31 : vector<8x1xf32>
    %33 = arith.mulf %14, %26 : vector<8x1xf32>
    %34 = arith.subf %32, %33 : vector<8x1xf32>
    %cst_9 = arith.constant 1.000000e-01 : f32
    %35 = vector.broadcast %cst_9 : f32 to vector<8x1xf32>
    %36 = arith.mulf %35, %34 : vector<8x1xf32>
    %37 = arith.addf %23, %36 : vector<8x1xf32>
    %cst_10 = arith.constant 0.000000e+00 : f32
    %38 = vector.broadcast %cst_10 : f32 to vector<8x1xf32>
    %39 = arith.select %7, %37, %38 : vector<8x1xi1>, vector<8x1xf32>
    %40 = vector.shape_cast %39 : vector<8x1xf32> to vector<1x8x1xf32>
    %cst_11 = arith.constant dense<0.000000e+00> : vector<1xf32>
    %41 = vector.multi_reduction <add>, %40, %cst_11 [1, 2] : vector<1x8x1xf32> to vector<1xf32>
    %42 = vector.shape_cast %41 : vector<1xf32> to vector<1x1x1xf32>
    %43 = vector.extract %42[0, 0, 0] : f32 from vector<1x1x1xf32>
    %44 = vector.broadcast %43 : f32 to vector<1x8x128xf32>
    %c0_12 = arith.constant 0 : index
    %c0_13 = arith.constant 0 : index
    %c0_14 = arith.constant 0 : index
    %45 = vector.load %arg3[%c0_12, %c0_13, %c0_14] : memref<1x8x128xf32, #tpu.memory_space<vmem>>, vector<1x8x128xf32>
    tpu.vector_store %arg3[%c0_12, %c0_13, %c0_14], %44 {strides = array<i32>} : memref<1x8x128xf32, #tpu.memory_space<vmem>>, vector<1x8x128xf32>,
    return
  }
  func.func @transform_0(%arg0: i32) -> (i32, i32) {
    %c0_i32 = arith.constant 0 : i32
    %c0_i32_0 = arith.constant 0 : i32
    return %arg0, %c0_i32 : i32, i32
  }
  func.func @transform_1(%arg0: i32) -> (i32, i32) {
    %c0_i32 = arith.constant 0 : i32
    %c0_i32_0 = arith.constant 0 : i32
    return %arg0, %c0_i32 : i32, i32
  }
  func.func @transform_2(%arg0: i32) -> (i32, i32, i32) {
    %c0_i32 = arith.constant 0 : i32
    %c0_i32_0 = arith.constant 0 : i32
    %c0_i32_1 = arith.constant 0 : i32
    return %arg0, %c0_i32, %c0_i32_0 : i32, i32, i32
  }
}

</mosaic_0001>

<llo_original>
// kernel: tpu_custom_call.1
$region0: #{tpu_custom_call.1}
  #allocation0 [shape = 'u32[]', space=smem, size = 0x4, offset = 0x4, fixed_abs, tag = 'smem constant byte address 0x4 - core index']
  #allocation1 [shape = 'u32[72,128]{1,0:T(1,128)}', space=vmem, size = 0x9000, scoped, tag = 'internal scratch']
  %s0 = inlined_call_operand.vmem [shape: f32[20,32], index: 0, kind: input, shape index: {}]
  %s1 = inlined_call_operand.vmem [shape: s32[20,1], index: 1, kind: input, shape index: {}]
  %s2 = inlined_call_operand.hbm [shape: f32[3,8,128], index: 2, kind: output, shape index: {}]
  %s3 = sld [smem:[#allocation0]]
  $region41: #{tpu_custom_call.1} parent=0
    _
  %s5 = ssub.s32 1, %s3
  %s6 = scalar_select 0, %s5, %s3
  $region1: #{tpu_custom_call.1} parent=0
    #allocation2 [shape = 'u8[8192]{0}', space=vmem, size = 0x2000, scoped, tag = 'output window, operand 0']
    #allocation3 [shape = 's32[2]{0}', space=sflag, size = 0x8, scoped, tag = 'scoped memory for tpu_custom_call.1']
    %7 = vsyncpa [#allocation3], 0
    %s8 = scalar_lea.sflag [#allocation3], 1
    %9 = vsyncpa %s8, 0
    loop: start=0, step=1, limit=5
    $region2: #{tpu_custom_call.1} parent=1 // loop_pre_header
      _
    $region3: #{tpu_custom_call.1} parent=1 // loop_header
      %s11 = sphi 0, %s15
      %p12 = scmp.ge.s32.totalorder %s11, 5
      %s21 = sphi 0, %s23
      %s24 = sphi 0, %s21
      %s25 = sphi 0, %s24
      %s41 = sphi 0, %s25
      %s47 = sphi 0, %s49
      %s50 = sphi 0, %s47
      %s51 = sphi 0, %s50
      %s67 = sphi 0, %s51
      %s73 = sphi 0, %s75
      %s76 = sphi 0, %s73
      %s77 = sphi 0, %s76
      %s93 = sphi 0, %s77
    $region4: #{tpu_custom_call.1} parent=1 // loop_header_branch
      %14 = sbr.rel (%p12) target = $region8
    $region5: #{tpu_custom_call.1} parent=1 // loop_body
      %s16 = ssub.s32 %s11, 1
      %s17 = ssub.s32 %s11, 2
      %s18 = sadd.s32 %s11, 1
      %s19 = ssub.s32 %s11, %s18
      %p20 = scmp.eq.s32.totalorder %s19, 0
      %s22 = sadd.s32 %s21, 1
      %s23 = scalar_select %p20, %s21, %s22
      %p26 = pneg %p20
      %p27 = scmp.eq.s32.totalorder %s11, 2
      %p28 = por %p26, %p27
      %p29 = scmp.ne.s32.totalorder %s21, %s24
      %p30 = scmp.eq.s32.totalorder %s11, 0
      %p31 = por %p29, %p30
      %p32 = scmp.ne.s32.totalorder %s21, %s24
      %p33 = scmp.eq.s32.totalorder %s16, 2
      %p34 = por %p32, %p33
      %p35 = scmp.ne.s32.totalorder %s24, %s25
      %p36 = scmp.eq.s32.totalorder %s16, 0
      %p37 = por %p35, %p36
      %p38 = scmp.ne.s32.totalorder %s24, %s25
      %p39 = scmp.eq.s32.totalorder %s17, 2
      %p40 = por %p38, %p39
      %p42 = scmp.ne.s32.totalorder %s25, %s41
      %p43 = scmp.eq.s32.totalorder %s17, 0
      %p44 = por %p42, %p43
      %s45 = ssub.s32 %s11, %s18
      %p46 = scmp.eq.s32.totalorder %s45, 0
      %s48 = sadd.s32 %s47, 1
      %s49 = scalar_select %p46, %s47, %s48
      %p52 = pneg %p46
      %p53 = scmp.eq.s32.totalorder %s11, 2
      %p54 = por %p52, %p53
      %p55 = scmp.ne.s32.totalorder %s47, %s50
      %p56 = scmp.eq.s32.totalorder %s11, 0
      %p57 = por %p55, %p56
      %p58 = scmp.ne.s32.totalorder %s47, %s50
      %p59 = scmp.eq.s32.totalorder %s16, 2
      %p60 = por %p58, %p59
      %p61 = scmp.ne.s32.totalorder %s50, %s51
      %p62 = scmp.eq.s32.totalorder %s16, 0
      %p63 = por %p61, %p62
      %p64 = scmp.ne.s32.totalorder %s50, %s51
      %p65 = scmp.eq.s32.totalorder %s17, 2
      %p66 = por %p64, %p65
      %p68 = scmp.ne.s32.totalorder %s51, %s67
      %p69 = scmp.eq.s32.totalorder %s17, 0
      %p70 = por %p68, %p69
      %s71 = ssub.s32 %s11, %s18
      %p72 = scmp.eq.s32.totalorder %s71, 0
      %s74 = sadd.s32 %s73, 1
      %s75 = scalar_select %p72, %s73, %s74
      %p78 = pneg %p72
      %p79 = scmp.eq.s32.totalorder %s11, 2
      %p80 = por %p78, %p79
      %p81 = scmp.ne.s32.totalorder %s73, %s76
      %p82 = scmp.eq.s32.totalorder %s11, 0
      %p83 = por %p81, %p82
      %p84 = scmp.ne.s32.totalorder %s73, %s76
      %p85 = scmp.eq.s32.totalorder %s16, 2
      %p86 = por %p84, %p85
      %p87 = scmp.ne.s32.totalorder %s76, %s77
      %p88 = scmp.eq.s32.totalorder %s16, 0
      %p89 = por %p87, %p88
      %p90 = scmp.ne.s32.totalorder %s76, %s77
      %p91 = scmp.eq.s32.totalorder %s17, 2
      %p92 = por %p90, %p91
      %p94 = scmp.ne.s32.totalorder %s77, %s93
      %p95 = scmp.eq.s32.totalorder %s17, 0
      %p96 = por %p94, %p95
      %p97 = scmp.le.s32.totalorder 1, %s11
      %p98 = scmp.lt.s32.totalorder %s11, 4
      %p99 = pnand %p97, %p98
      %p100 = pneg %p99
      // Predicated region
      $region9: #{tpu_custom_call.1} parent=5 // pred_check
        _
      $region10: #{tpu_custom_call.1} parent=5 // pred_check_branch
        %102 = sbr.rel (%p99) target = $region12
      $region11: #{tpu_custom_call.1} parent=5 // pred_region
        %s103 = ssub.s32 %s11, 1
      $region12: #{tpu_custom_call.1} parent=5 // pred_fallthru
        _
      %p104 = scmp.lt.s32.totalorder %s11, 3
      // Predicated region
      $region13: #{tpu_custom_call.1} parent=5 // pred_check
        %p105 = pneg %p104
      $region14: #{tpu_custom_call.1} parent=5 // pred_check_branch
        %107 = sbr.rel (%p105) target = $region16
      $region15: #{tpu_custom_call.1} parent=5 // pred_region
        // Predicated region
        $region17: #{tpu_custom_call.1} parent=15 // pred_check
          %p108 = pneg %p31
        $region18: #{tpu_custom_call.1} parent=15 // pred_check_branch
          %110 = sbr.rel (%p108) target = $region20
        $region19: #{tpu_custom_call.1} parent=15 // pred_region
          %p111 = scmp.lt.s32.totalorder %s11, 2
          %s112 = scalar_select %p111, %s11, 2
          %s113 = smul.addr %s112, 8
          %s114 = scalar_lea.vmem %s0, %s113
        $region20: #{tpu_custom_call.1} parent=15 // pred_fallthru
          _
        // Predicated region
        $region21: #{tpu_custom_call.1} parent=15 // pred_check
          %p115 = pneg %p57
        $region22: #{tpu_custom_call.1} parent=15 // pred_check_branch
          %117 = sbr.rel (%p115) target = $region24
        $region23: #{tpu_custom_call.1} parent=15 // pred_region
          %p118 = scmp.lt.s32.totalorder %s11, 2
          %s119 = scalar_select %p118, %s11, 2
          %s120 = smul.addr %s119, 8
          %s121 = scalar_lea.vmem %s1, %s120
        $region24: #{tpu_custom_call.1} parent=15 // pred_fallthru
          _
      $region16: #{tpu_custom_call.1} parent=5 // pred_fallthru
        _
      %p122 = scmp.le.s32.totalorder 1, %s11
      %p123 = scmp.lt.s32.totalorder %s11, 4
      %p124 = pnand %p122, %p123
      %p125 = pneg %p124
      // Predicated region
      $region25: #{tpu_custom_call.1} parent=5 // pred_check
        _
      $region26: #{tpu_custom_call.1} parent=5 // pred_check_branch
        %127 = sbr.rel (%p124) target = $region28
      $region27: #{tpu_custom_call.1} parent=5 // pred_region
        %s128 = ssub.s32 %s11, 1
        %p129 = scmp.lt.s32.totalorder %s16, 2
        %s130 = scalar_select %p129, %s16, 2
        %s131 = smul.addr %s130, 8
        %s132 = scalar_lea.vmem %s0, %s131
        %p133 = pneg %p37
        %p134 = pneg %p34
        %p135 = scmp.lt.s32.totalorder %s16, 2
        %s136 = scalar_select %p135, %s16, 2
        %s137 = smul.addr %s136, 8
        %s138 = scalar_lea.vmem %s1, %s137
        %p139 = pneg %p63
        %p140 = pneg %p60
        %p141 = pneg %p89
        %p142 = pneg %p86
        %s143 = sand.u32 %s76, 1
        %s144 = scalar_lea.sflag [#allocation3], %s143
        %s145 = sand.u32 %s76, 1
        %s146 = smul.addr %s145, 8
        %s147 = scalar_lea.vmem [#allocation2], %s146
        %p148 = scmp.lt.s32.totalorder %s16, 2
        %s149 = scalar_select %p148, %s16, 2
        %s150 = smul.addr %s149, 8
        %s151 = scalar_lea.vmem %s0, %s150
        %p152 = scmp.lt.s32.totalorder %s16, 2
        %s153 = scalar_select %p152, %s16, 2
        %s154 = smul.addr %s153, 8
        %s155 = scalar_lea.vmem %s1, %s154
        %v156 = vld [vmem:[%s151] sm:$0xff]
        %v157 = vld [vmem:[%s155] sm:$0xff]
        %v158 = vlaneseq
        %v159 = vshrl.u32 %v158, 7
        %s160 = smul.u32 %s16, 8
        %v161 = vstv %s160
        %v162 = vadd.s32 %v159, %v161
        %vm163 = vcmp.lt.s32.totalorder %v162, 20
        %v164 = vlaneseq
        %v165 = vand.u32 %v164, 127
        %166 = vset.pattern.permute.xlu0 0
        %167 = vperm.xlu0 %166, %v157
        %v168 = vpop.permute.xlu0 %167
        %vm169 = vcmp.eq.s32.totalorder %v165, %v168
        %v170 = vsel %vm169, %v156, 0.0
        %vm171 = vcmask 261120
        %v172 = vsel %vm171, %v170, 0.0
        %173 = vadd.xlane.f32.xlu0 %v172
        %v174 = vpop.xlane.xlu0 %173
        %v175 = vmul.f32 %v156, %v156
        %v176 = vsel %vm171, %v175, 0.0
        %177 = vadd.xlane.f32.xlu0 %v176
        %v178 = vpop.xlane.xlu0 %177
        %v179 = vmax.f32 %v178, 1e-16
        %v180 = vrsqrt.pop %v179
        %v181 = vmul.f32 %v180, %v179
        %v182 = vmul.f32 %v181, %v180
        %v183 = vmul.f32 0.5, %v182
        %v184 = vsub.f32 1.5, %v183
        %v185 = vmul.f32 %v180, %v184
        %vm186 = vweird.f32 %v179
        %vm187 = vweird.f32 %v180
        %vm188 = vmor %vm186, %vm187
        %v189 = vsel %vm188, %v180, %v185
        %v190 = vmul.f32 %v174, %v189
        %v191 = vsub.f32 1.0, %v190
        %v192 = vmax.f32 %v178, 1e-24
        %v193 = vrsqrt.pop %v192
        %v194 = vmul.f32 %v193, %v192
        %v195 = vmul.f32 %v194, %v193
        %v196 = vmul.f32 0.5, %v195
        %v197 = vsub.f32 1.5, %v196
        %v198 = vmul.f32 %v193, %v197
        %vm199 = vweird.f32 %v192
        %vm200 = vweird.f32 %v193
        %vm201 = vmor %vm199, %vm200
        %v202 = vsel %vm201, %v193, %v198
        %v203 = vmul.f32 %v156, %v202
        %v204 = vmul.f32 %v203, 1.442695
        %v205 = vpow.pop %v204
        %v206 = vsel %vm171, %v205, 0.0
        %207 = vadd.xlane.f32.xlu0 %v206
        %v208 = vpop.xlane.xlu0 %207
        %v209 = vlog2.pop %v208
        %v210 = vmul.f32 %v209, 0.6931472
        %v211 = vmul.f32 %v174, %v202
        %v212 = vsub.f32 %v210, %v211
        %v213 = vmul.f32 %v212, 0.1
        %v214 = vadd.f32 %v191, %v213
        %v215 = vsel %vm163, %v214, 0.0
        %vm216 = vcmask 7168
        %v217 = vsel %vm216, %v215, 0.0
        %218 = vadd.xlane.f32.xlu0 %v217
        %v219 = vpop.xlane.xlu0 %218
        %v220 = vrot.slane %v219, 4
        %v221 = vadd.f32 %v219, %v220
        %v222 = vrot.slane %v221, 2
        %v223 = vadd.f32 %v221, %v222
        %v224 = vrot.slane %v223, 1
        %v225 = vadd.f32 %v223, %v224
        %s226 = vtos %v225
        %v227 = vstv %s226
        %228 = vst [vmem:[%s147] sm:$0xff] %v227
        %s229 = sand.u32 %s76, 1
        %s230 = scalar_lea.sflag [#allocation3], %s229
        %s231 = sand.u32 %s76, 1
        %s232 = smul.addr %s231, 8
        %s233 = scalar_lea.vmem [#allocation2], %s232
        // Predicated region
        $region29: #{tpu_custom_call.1} parent=27 // pred_check
          %p234 = pneg %p86
        $region30: #{tpu_custom_call.1} parent=27 // pred_check_branch
          %236 = sbr.rel (%p234) target = $region32
        $region31: #{tpu_custom_call.1} parent=27 // pred_region
          %238 = vsyncadd %s230, 0
          %s239 = smul.addr %s16, 8
          %s240 = scalar_lea.hbm %s2, %s239
          %s242 = sshll.u32 %s233, 4
          %s243 = int_to_ptr.vmem [resolvable:$true] %s242
          %s244 = sshll.u32 %s240, 4
          %s245 = int_to_ptr.hbm [resolvable:$true] %s244
          %247 = dma.vmem_to_hbm [thread:$0]  %s243, 128, %s245, %s230
        $region32: #{tpu_custom_call.1} parent=27 // pred_fallthru
          _
      $region28: #{tpu_custom_call.1} parent=5 // pred_fallthru
        _
      %p248 = scmp.le.s32.totalorder 2, %s11
      // Predicated region
      $region33: #{tpu_custom_call.1} parent=5 // pred_check
        %p249 = pneg %p248
      $region34: #{tpu_custom_call.1} parent=5 // pred_check_branch
        %251 = sbr.rel (%p249) target = $region36
      $region35: #{tpu_custom_call.1} parent=5 // pred_region
        %s252 = ssub.s32 %s11, 2
        // Predicated region
        $region37: #{tpu_custom_call.1} parent=35 // pred_check
          %p253 = pneg %p92
        $region38: #{tpu_custom_call.1} parent=35 // pred_check_branch
          %255 = sbr.rel (%p253) target = $region40
        $region39: #{tpu_custom_call.1} parent=35 // pred_region
          %s256 = sand.u32 %s77, 1
          %s257 = scalar_lea.sflag [#allocation3], %s256
          %s258 = sand.u32 %s77, 1
          %s259 = smul.addr %s258, 8
          %s260 = scalar_lea.vmem [#allocation2], %s259
          %262 = dma.done %s257, 128
        $region40: #{tpu_custom_call.1} parent=35 // pred_fallthru
          _
      $region36: #{tpu_custom_call.1} parent=5 // pred_fallthru
        _
    $region6: #{tpu_custom_call.1} parent=1 // loop_footer
      %s15 = sadd.s32 1, %s11
    $region7: #{tpu_custom_call.1} parent=1 // loop_footer_branch
      %10 = sbr.rel target = $region3
    $region8: #{tpu_custom_call.1} parent=1 // loop_exit
      _
    %263 = vsyncpa [#allocation3], 1
    %s264 = scalar_lea.sflag [#allocation3], 1
    %265 = vsyncpa %s264, 1

</llo_original>
